<compile_context>
chip_gen: v5e
topology: v5e:2x2
jax: 0.10.0
libtpu: 0.0.40
codegen_flags: <defaults>
</compile_context>

<pallas_src>
import jax
import jax.numpy as jnp
from jax.experimental import pallas as pl
from jax.experimental.pallas import tpu as pltpu

STATE_DIM = 28
ACTION_DIM = 20
HIDDEN = 512
FC2_PAD = 128                  # MXU lane width for the fc2 matmul (stored width stays 20)
MAX_TILE_B = 2048              # largest batch tile per grid step
MIN_SPLIT_B = 16               # force >=2 grid steps above this (feeds both v7x cores)
VMEM_LIMIT_BYTES = 32 << 20    # explicit; ~8-9 MiB actually used at tile_b=2048


def _round_up(n, m):
    return ((n + m - 1) // m) * m


def dqn_kernel(x_ref, w1_ref, b1_ref, w2_ref, b2_ref, o_ref):
    # fc1 + ReLU: bf16 operands on the MXU, f32 accumulation, f32 epilogue on the VPU.
    xb = x_ref[...].astype(jnp.bfloat16)
    h = jnp.dot(xb, w1_ref[...], preferred_element_type=jnp.float32)      # (tile_b, 512)
    h = jnp.maximum(h + b1_ref[...], 0.0)
    # fc2: computed at 128 lanes for the MXU; only the 20 real columns are stored.
    o = jnp.dot(h.astype(jnp.bfloat16), w2_ref[...],
                preferred_element_type=jnp.float32)                       # (tile_b, 128)
    o_ref[...] = (o[:, :ACTION_DIM] + b2_ref[...]).astype(o_ref.dtype)    # (tile_b, 20)


@jax.jit
def dqn_forward(x, w1, b1, w2, b2):
    """x: (B, STATE_DIM) f32; w1: (STATE_DIM, HIDDEN); b1: (1, HIDDEN);
    w2: (HIDDEN, ACTION_DIM); b2: (1, ACTION_DIM). Returns (B, ACTION_DIM) f32."""
    B = x.shape[0]

    # Balanced batch tiling (see header comment).
    min_steps = 2 if B >= MIN_SPLIT_B else 1
    n_steps = max(pl.cdiv(B, MAX_TILE_B), min_steps)
    tile_b = _round_up(pl.cdiv(B, n_steps), 8)
    b_pad = n_steps * tile_b

    if b_pad != B:
        x = jnp.pad(x, ((0, b_pad - B), (0, 0)))   # zero rows, sliced away below

    # Weights: bf16 for the MXU (f32 accumulation in-kernel); w2 lane-padded to 128
    # for the matmul only (padded columns are zero and never stored).
    w1_bf = w1.astype(jnp.bfloat16)
    w2_bf = jnp.pad(w2, ((0, 0), (0, FC2_PAD - ACTION_DIM))).astype(jnp.bfloat16)
    b1_f = b1.reshape(1, HIDDEN).astype(jnp.float32)
    b2_f = b2.reshape(1, ACTION_DIM).astype(jnp.float32)

    cost = pl.CostEstimate(
        flops=2 * b_pad * (STATE_DIM * HIDDEN + HIDDEN * FC2_PAD),
        transcendentals=0,
        bytes_accessed=(x.size * 4 + w1_bf.size * 2 + b1_f.size * 4
                        + w2_bf.size * 2 + b2_f.size * 4
                        + b_pad * ACTION_DIM * 4),
    )

    out = pl.pallas_call(
        dqn_kernel,
        out_shape=jax.ShapeDtypeStruct((b_pad, ACTION_DIM), jnp.float32),
        grid_spec=pltpu.PrefetchScalarGridSpec(
            num_scalar_prefetch=0,
            grid=(n_steps,),
            in_specs=[
                pl.BlockSpec((tile_b, STATE_DIM), lambda i: (i, 0)),    # x: streamed
                pl.BlockSpec((STATE_DIM, HIDDEN), lambda i: (0, 0)),    # w1: resident
                pl.BlockSpec((1, HIDDEN), lambda i: (0, 0)),            # b1: resident
                pl.BlockSpec((HIDDEN, FC2_PAD), lambda i: (0, 0)),      # w2: resident
                pl.BlockSpec((1, ACTION_DIM), lambda i: (0, 0)),        # b2: resident
            ],
            out_specs=pl.BlockSpec((tile_b, ACTION_DIM), lambda i: (i, 0)),
        ),
        compiler_params=pltpu.CompilerParams(
            dimension_semantics=("parallel",),      # batch steps split across TCs
            vmem_limit_bytes=VMEM_LIMIT_BYTES,
        ),
        cost_estimate=cost,
    )(x, w1_bf, b1_f, w2_bf, b2_f)

    return out if b_pad == B else out[:B]


def init_params(key):
    """Deterministic synthetic parameters matching nn.Linear shapes
    (stored as (in, out) = PyTorch weight transposed)."""
    k1, k2, k3, k4 = jax.random.split(key, 4)
    s1 = 1.0 / jnp.sqrt(jnp.float32(STATE_DIM))
    s2 = 1.0 / jnp.sqrt(jnp.float32(HIDDEN))
    w1 = jax.random.uniform(k1, (STATE_DIM, HIDDEN), jnp.float32, -s1, s1)
    b1 = jax.random.uniform(k2, (1, HIDDEN), jnp.float32, -s1, s1)
    w2 = jax.random.uniform(k3, (HIDDEN, ACTION_DIM), jnp.float32, -s2, s2)
    b2 = jax.random.uniform(k4, (1, ACTION_DIM), jnp.float32, -s2, s2)
    return w1, b1, w2, b2


def reference_forward_f32(x, w1, b1, w2, b2):
    h = jnp.maximum(x @ w1 + b1, 0.0)
    return h @ w2 + b2


def reference_forward_bf16(x, w1, b1, w2, b2):
    # Mirrors the kernel precision policy: bf16 matmul operands, f32 accumulation,
    # f32 bias/ReLU/output.
    h = jnp.dot(x.astype(jnp.bfloat16), w1.astype(jnp.bfloat16),
                preferred_element_type=jnp.float32) + b1
    h = jnp.maximum(h, 0.0)
    return jnp.dot(h.astype(jnp.bfloat16), w2.astype(jnp.bfloat16),
                   preferred_element_type=jnp.float32) + b2


def _check(B, kx, params):
    x = jax.random.normal(kx, (B, STATE_DIM), jnp.float32)
    out = jax.block_until_ready(dqn_forward(x, *params))
    assert out.shape == (B, ACTION_DIM), out.shape
    ref_bf16 = reference_forward_bf16(x, *params)
    ref_f32 = reference_forward_f32(x, *params)
    assert jnp.allclose(out, ref_bf16, atol=1e-3, rtol=1e-3), f"B={B}: mismatch vs bf16 ref"
    assert jnp.allclose(out, ref_f32, atol=5e-2, rtol=5e-2), f"B={B}: mismatch vs f32 ref"


if __name__ == "__main__":
    key = jax.random.PRNGKey(0)
    kx1, kx2, kp = jax.random.split(key, 3)
    params = init_params(kp)

    _check(2, kx1, params)      # tiny batch: single grid step, row-padded to 8
    _check(300, kx2, params)    # exercises balanced 2-step grid / dual-core path

    print("KERNEL_OK")
</pallas_src>

<mosaic_0001>
module attributes {stable_mosaic.version = 11 : i64} {
  func.func @dqn_kernel(%arg0: i32, %arg1: memref<8x28xf32, #tpu.memory_space<vmem>>, %arg2: memref<28x512xbf16, #tpu.memory_space<vmem>>, %arg3: memref<1x512xf32, #tpu.memory_space<vmem>>, %arg4: memref<512x128xbf16, #tpu.memory_space<vmem>>, %arg5: memref<1x20xf32, #tpu.memory_space<vmem>>, %arg6: memref<8x20xf32, #tpu.memory_space<vmem>>) attributes {dimension_semantics = [#tpu.dimension_semantics<parallel>], iteration_bounds = array<i64: 1>, scalar_prefetch = 0 : i64, scratch_operands = 0 : i64, tpu.core_type = #tpu.core_type<tc>, window_params = [{transform_indices = @transform_0, window_bounds = array<i64: 8, 28>}, {pipeline_mode = #tpu.pipeline_mode<synchronous>, transform_indices = @transform_1, window_bounds = array<i64: 28, 512>}, {pipeline_mode = #tpu.pipeline_mode<synchronous>, transform_indices = @transform_2, window_bounds = array<i64: 1, 512>}, {pipeline_mode = #tpu.pipeline_mode<synchronous>, transform_indices = @transform_3, window_bounds = array<i64: 512, 128>}, {pipeline_mode = #tpu.pipeline_mode<synchronous>, transform_indices = @transform_4, window_bounds = array<i64: 1, 20>}, {transform_indices = @transform_5, window_bounds = array<i64: 8, 20>}]} {
    %c0 = arith.constant 0 : index
    %c0_0 = arith.constant 0 : index
    %0 = vector.load %arg1[%c0, %c0_0] : memref<8x28xf32, #tpu.memory_space<vmem>>, vector<8x28xf32>
    %1 = arith.truncf %0 : vector<8x28xf32> to vector<8x28xbf16>
    %c0_1 = arith.constant 0 : index
    %c0_2 = arith.constant 0 : index
    %2 = vector.load %arg2[%c0_1, %c0_2] : memref<28x512xbf16, #tpu.memory_space<vmem>>, vector<28x512xbf16>
    %cst = arith.constant dense<0.000000e+00> : vector<8x512xf32>
    %3 = tpu.matmul %1, %2, %cst {dimension_numbers = #tpu.dot_dimension_numbers<[1], [0], [0], [1], [0, 0, 1, 1], [], []>} : vector<8x28xbf16>, vector<28x512xbf16>, vector<8x512xf32> -> vector<8x512xf32>
    %c0_3 = arith.constant 0 : index
    %c0_4 = arith.constant 0 : index
    %4 = vector.load %arg3[%c0_3, %c0_4] : memref<1x512xf32, #tpu.memory_space<vmem>>, vector<1x512xf32>
    %5 = vector.broadcast %4 : vector<1x512xf32> to vector<8x512xf32>
    %6 = arith.addf %3, %5 : vector<8x512xf32>
    %cst_5 = arith.constant 0.000000e+00 : f32
    %7 = vector.broadcast %cst_5 : f32 to vector<8x512xf32>
    %8 = arith.maximumf %6, %7 : vector<8x512xf32>
    %9 = arith.truncf %8 : vector<8x512xf32> to vector<8x512xbf16>
    %c0_6 = arith.constant 0 : index
    %c0_7 = arith.constant 0 : index
    %10 = vector.load %arg4[%c0_6, %c0_7] : memref<512x128xbf16, #tpu.memory_space<vmem>>, vector<512x128xbf16>
    %cst_8 = arith.constant dense<0.000000e+00> : vector<8x128xf32>
    %11 = tpu.matmul %9, %10, %cst_8 {dimension_numbers = #tpu.dot_dimension_numbers<[1], [0], [0], [1], [0, 0, 1, 1], [], []>} : vector<8x512xbf16>, vector<512x128xbf16>, vector<8x128xf32> -> vector<8x128xf32>
    %12 = vector.extract_strided_slice %11 {offsets = [0, 0], sizes = [8, 20], strides = [1, 1]} : vector<8x128xf32> to vector<8x20xf32>
    %c0_9 = arith.constant 0 : index
    %c0_10 = arith.constant 0 : index
    %13 = vector.load %arg5[%c0_9, %c0_10] : memref<1x20xf32, #tpu.memory_space<vmem>>, vector<1x20xf32>
    %14 = vector.broadcast %13 : vector<1x20xf32> to vector<8x20xf32>
    %15 = arith.addf %12, %14 : vector<8x20xf32>
    %c0_11 = arith.constant 0 : index
    %c0_12 = arith.constant 0 : index
    %16 = vector.load %arg6[%c0_11, %c0_12] : memref<8x20xf32, #tpu.memory_space<vmem>>, vector<8x20xf32>
    tpu.vector_store %arg6[%c0_11, %c0_12], %15 {strides = array<i32>} : memref<8x20xf32, #tpu.memory_space<vmem>>, vector<8x20xf32>,
    return
  }
  func.func @transform_0(%arg0: i32) -> (i32, i32) {
    %c0_i32 = arith.constant 0 : i32
    %c0_i32_0 = arith.constant 0 : i32
    return %arg0, %c0_i32 : i32, i32
  }
  func.func @transform_1(%arg0: i32) -> (i32, i32) {
    %c0_i32 = arith.constant 0 : i32
    %c0_i32_0 = arith.constant 0 : i32
    %c0_i32_1 = arith.constant 0 : i32
    return %c0_i32, %c0_i32_0 : i32, i32
  }
  func.func @transform_2(%arg0: i32) -> (i32, i32) {
    %c0_i32 = arith.constant 0 : i32
    %c0_i32_0 = arith.constant 0 : i32
    %c0_i32_1 = arith.constant 0 : i32
    return %c0_i32, %c0_i32_0 : i32, i32
  }
  func.func @transform_3(%arg0: i32) -> (i32, i32) {
    %c0_i32 = arith.constant 0 : i32
    %c0_i32_0 = arith.constant 0 : i32
    %c0_i32_1 = arith.constant 0 : i32
    return %c0_i32, %c0_i32_0 : i32, i32
  }
  func.func @transform_4(%arg0: i32) -> (i32, i32) {
    %c0_i32 = arith.constant 0 : i32
    %c0_i32_0 = arith.constant 0 : i32
    %c0_i32_1 = arith.constant 0 : i32
    return %c0_i32, %c0_i32_0 : i32, i32
  }
  func.func @transform_5(%arg0: i32) -> (i32, i32) {
    %c0_i32 = arith.constant 0 : i32
    %c0_i32_0 = arith.constant 0 : i32
    return %arg0, %c0_i32 : i32, i32
  }
}

</mosaic_0001>

<llo_original>
// kernel: dqn_forward.1
$region0: #{dqn_forward.1}
  #allocation0 [shape = 'u32[]', space=smem, size = 0x4, offset = 0x4, fixed_abs, tag = 'smem constant byte address 0x4 - core index']
  #allocation1 [shape = 'u32[72,128]{1,0:T(1,128)}', space=vmem, size = 0x9000, scoped, tag = 'internal scratch']
  %s0 = inlined_call_operand.vmem [shape: f32[8,28], index: 0, kind: input, shape index: {}]
  %s1 = inlined_call_operand.vmem [shape: bf16[28,512], index: 1, kind: input, shape index: {}]
  %s2 = inlined_call_operand.vmem [shape: f32[1,512], index: 2, kind: input, shape index: {}]
  %s3 = inlined_call_operand.vmem [shape: bf16[512,128], index: 3, kind: input, shape index: {}]
  %s4 = inlined_call_operand.vmem [shape: f32[1,20], index: 4, kind: input, shape index: {}]
  %s5 = inlined_call_operand.vmem [shape: f32[8,20], index: 5, kind: output, shape index: {}]
  %s6 = sld [smem:[#allocation0]]
  $region30: #{dqn_forward.1} parent=0
    _
  %s8 = ssub.s32 1, %s6
  %s9 = scalar_select 0, %s8, %s6
  // Predicated region
  $region2: #{dqn_forward.1} parent=0 // pred_check
    _
  $region3: #{dqn_forward.1} parent=0 // pred_check_branch
    %11 = sbr.rel (0) target = $region5
  $region4: #{dqn_forward.1} parent=0 // pred_region
    _
  $region5: #{dqn_forward.1} parent=0 // pred_fallthru
    _
  // Predicated region
  $region6: #{dqn_forward.1} parent=0 // pred_check
    _
  $region7: #{dqn_forward.1} parent=0 // pred_check_branch
    %13 = sbr.rel (0) target = $region9
  $region8: #{dqn_forward.1} parent=0 // pred_region
    _
  $region9: #{dqn_forward.1} parent=0 // pred_fallthru
    _
  // Predicated region
  $region10: #{dqn_forward.1} parent=0 // pred_check
    _
  $region11: #{dqn_forward.1} parent=0 // pred_check_branch
    %15 = sbr.rel (0) target = $region13
  $region12: #{dqn_forward.1} parent=0 // pred_region
    _
  $region13: #{dqn_forward.1} parent=0 // pred_fallthru
    _
  // Predicated region
  $region14: #{dqn_forward.1} parent=0 // pred_check
    _
  $region15: #{dqn_forward.1} parent=0 // pred_check_branch
    %17 = sbr.rel (0) target = $region17
  $region16: #{dqn_forward.1} parent=0 // pred_region
    _
  $region17: #{dqn_forward.1} parent=0 // pred_fallthru
    _
  // Predicated region
  $region18: #{dqn_forward.1} parent=0 // pred_check
    _
  $region19: #{dqn_forward.1} parent=0 // pred_check_branch
    %19 = sbr.rel (0) target = $region21
  $region20: #{dqn_forward.1} parent=0 // pred_region
    _
  $region21: #{dqn_forward.1} parent=0 // pred_fallthru
    _
  %v21 = vld [vmem:[%s0] sm:$0xff]
  %v22 = vpack.c.bf16 %v21, %v21
  %v23 = vld [vmem:[%s1] sm:$0xff]
  %v24 = vld [vmem:[%s1 + $0x8] sm:$0xff]
  %v25 = vld [vmem:[%s1 + $0x10] sm:$0xff]
  %v26 = vld [vmem:[%s1 + $0x18] sm:$0xff]
  %v27 = vld [vmem:[%s1 + $0x20] sm:$0xff]
  %v28 = vld [vmem:[%s1 + $0x28] sm:$0xff]
  %v29 = vld [vmem:[%s1 + $0x30] sm:$0x33]
  %v30 = vld [vmem:[%s1 + $0x38] sm:$0x33]
  %v31 = vld [vmem:[%s2] sm:$0xf]
  %v33 = vperm.slane %v31, 0
  %v34 = vperm.slane %v31, 1
  %v35 = vperm.slane %v31, 2
  %v36 = vperm.slane %v31, 3
  %v49 = vunpack.c.l.b16 %v23
  %v50 = vunpack.c.h.b16 %v23
  %v51 = vunpack.c.l.b16 %v24
  %v52 = vunpack.c.h.b16 %v24
  %v53 = vunpack.c.l.b16 %v25
  %v54 = vunpack.c.h.b16 %v25
  %v55 = vunpack.c.l.b16 %v26
  %v56 = vunpack.c.h.b16 %v26
  %v57 = vunpack.c.l.b16 %v27
  %v58 = vunpack.c.h.b16 %v27
  %v59 = vunpack.c.l.b16 %v28
  %v60 = vunpack.c.h.b16 %v28
  %v61 = vunpack.c.l.b16 %v29
  %v62 = vunpack.c.h.b16 %v29
  %v63 = vunpack.c.l.b16 %v30
  %v64 = vunpack.c.h.b16 %v30
  %v65 = vpack.c.b16 %v53, %v49
  %v66 = vpack.c.b16 %v54, %v50
  %v67 = vpack.c.b16 %v55, %v51
  %v68 = vpack.c.b16 %v56, %v52
  %v69 = vpack.c.b16 %v61, %v57
  %v70 = vpack.c.b16 %v62, %v58
  %v71 = vpack.c.b16 %v63, %v59
  %v72 = vpack.c.b16 %v64, %v60
  %vm77 = vcmask 228352
  %v79 = vsel %vm77, %v22, 0
  %vm81 = vcmask 1045504
  %v83 = vsel %vm81, %v69, 0
  %v86 = vsel %vm81, %v70, 0
  %v89 = vsel %vm81, %v71, 0
  %v92 = vsel %vm81, %v72, 0
  %94 = vmatpush.bf16.msra.mxu0 0
  %95 = vmatpush.bf16.msra.mxu0 0
  %96 = vmatpush.bf16.msra.mxu0 0
  %97 = vmatpush.bf16.msra.mxu0 0
  %98 = vmatpush.bf16.msra.mxu0 0
  %99 = vmatpush.bf16.msra.mxu0 0
  %100 = vmatpush.bf16.msra.mxu0 %v83
  %101 = vmatpush.bf16.msra.mxu0 %v65
  %102 = vmatmul.bf16.gmra.mxu0 %v79
  %v103 = vpop.f32.mrf.mxu0
  %v104 = vadd.f32 %v33, %v103
  %v105 = vpop.f32.mrf.mxu0
  %106 = vdwg.mxu0
  %107 = vmatpush.bf16.msra.mxu0 0
  %108 = vmatpush.bf16.msra.mxu0 0
  %109 = vmatpush.bf16.msra.mxu0 0
  %110 = vmatpush.bf16.msra.mxu0 0
  %111 = vmatpush.bf16.msra.mxu0 0
  %112 = vmatpush.bf16.msra.mxu0 0
  %113 = vmatpush.bf16.msra.mxu0 %v86
  %114 = vmatpush.bf16.msra.mxu0 %v66
  %115 = vmatmul.bf16.gmra.mxu0 %v79
  %v116 = vpop.f32.mrf.mxu0
  %v117 = vadd.f32 %v34, %v116
  %v118 = vpop.f32.mrf.mxu0
  %119 = vdwg.mxu0
  %120 = vmatpush.bf16.msra.mxu0 0
  %121 = vmatpush.bf16.msra.mxu0 0
  %122 = vmatpush.bf16.msra.mxu0 0
  %123 = vmatpush.bf16.msra.mxu0 0
  %124 = vmatpush.bf16.msra.mxu0 0
  %125 = vmatpush.bf16.msra.mxu0 0
  %126 = vmatpush.bf16.msra.mxu0 %v89
  %127 = vmatpush.bf16.msra.mxu0 %v67
  %128 = vmatmul.bf16.gmra.mxu0 %v79
  %v129 = vpop.f32.mrf.mxu0
  %v130 = vadd.f32 %v35, %v129
  %v131 = vpop.f32.mrf.mxu0
  %132 = vdwg.mxu0
  %133 = vmatpush.bf16.msra.mxu0 0
  %134 = vmatpush.bf16.msra.mxu0 0
  %135 = vmatpush.bf16.msra.mxu0 0
  %136 = vmatpush.bf16.msra.mxu0 0
  %137 = vmatpush.bf16.msra.mxu0 0
  %138 = vmatpush.bf16.msra.mxu0 0
  %139 = vmatpush.bf16.msra.mxu0 %v92
  %140 = vmatpush.bf16.msra.mxu0 %v68
  %141 = vmatmul.bf16.gmra.mxu0 %v79
  %v142 = vpop.f32.mrf.mxu0
  %v143 = vadd.f32 %v36, %v142
  %v144 = vpop.f32.mrf.mxu0
  %145 = vdwg.mxu0
  %v146 = vmax.f32 %v104, 0.0
  %v147 = vmax.f32 %v117, 0.0
  %v148 = vmax.f32 %v130, 0.0
  %v149 = vmax.f32 %v143, 0.0
  %v150 = vpack.c.bf16 %v146, %v146
  %v151 = vpack.c.bf16 %v147, %v147
  %v152 = vpack.c.bf16 %v148, %v148
  %v153 = vpack.c.bf16 %v149, %v149
  %v154 = vld [vmem:[%s3] sm:$0xf]
  %v155 = vld [vmem:[%s3 + $0x4] sm:$0xf]
  %v156 = vld [vmem:[%s3 + $0x8] sm:$0xf]
  %v157 = vld [vmem:[%s3 + $0xc] sm:$0xf]
  %v158 = vld [vmem:[%s3 + $0x10] sm:$0xf]
  %v159 = vld [vmem:[%s3 + $0x14] sm:$0xf]
  %v160 = vld [vmem:[%s3 + $0x18] sm:$0xf]
  %v161 = vld [vmem:[%s3 + $0x1c] sm:$0xf]
  %v162 = vld [vmem:[%s3 + $0x20] sm:$0xf]
  %v163 = vld [vmem:[%s3 + $0x24] sm:$0xf]
  %v164 = vld [vmem:[%s3 + $0x28] sm:$0xf]
  %v165 = vld [vmem:[%s3 + $0x2c] sm:$0xf]
  %v166 = vld [vmem:[%s3 + $0x30] sm:$0xf]
  %v167 = vld [vmem:[%s3 + $0x34] sm:$0xf]
  %v168 = vld [vmem:[%s3 + $0x38] sm:$0xf]
  %v169 = vld [vmem:[%s3 + $0x3c] sm:$0xf]
  %v170 = vld [vmem:[%s3 + $0x40] sm:$0xf]
  %v171 = vld [vmem:[%s3 + $0x44] sm:$0xf]
  %v172 = vld [vmem:[%s3 + $0x48] sm:$0xf]
  %v173 = vld [vmem:[%s3 + $0x4c] sm:$0xf]
  %v174 = vld [vmem:[%s3 + $0x50] sm:$0xf]
  %v175 = vld [vmem:[%s3 + $0x54] sm:$0xf]
  %v176 = vld [vmem:[%s3 + $0x58] sm:$0xf]
  %v177 = vld [vmem:[%s3 + $0x5c] sm:$0xf]
  %v178 = vld [vmem:[%s3 + $0x60] sm:$0xf]
  %v179 = vld [vmem:[%s3 + $0x64] sm:$0xf]
  %v180 = vld [vmem:[%s3 + $0x68] sm:$0xf]
  %v181 = vld [vmem:[%s3 + $0x6c] sm:$0xf]
  %v182 = vld [vmem:[%s3 + $0x70] sm:$0xf]
  %v183 = vld [vmem:[%s3 + $0x74] sm:$0xf]
  %v184 = vld [vmem:[%s3 + $0x78] sm:$0xf]
  %v185 = vld [vmem:[%s3 + $0x7c] sm:$0xf]
  %v186 = vld [vmem:[%s3 + $0x80] sm:$0xf]
  %v187 = vld [vmem:[%s3 + $0x84] sm:$0xf]
  %v188 = vld [vmem:[%s3 + $0x88] sm:$0xf]
  %v189 = vld [vmem:[%s3 + $0x8c] sm:$0xf]
  %v190 = vld [vmem:[%s3 + $0x90] sm:$0xf]
  %v191 = vld [vmem:[%s3 + $0x94] sm:$0xf]
  %v192 = vld [vmem:[%s3 + $0x98] sm:$0xf]
  %v193 = vld [vmem:[%s3 + $0x9c] sm:$0xf]
  %v194 = vld [vmem:[%s3 + $0xa0] sm:$0xf]
  %v195 = vld [vmem:[%s3 + $0xa4] sm:$0xf]
  %v196 = vld [vmem:[%s3 + $0xa8] sm:$0xf]
  %v197 = vld [vmem:[%s3 + $0xac] sm:$0xf]
  %v198 = vld [vmem:[%s3 + $0xb0] sm:$0xf]
  %v199 = vld [vmem:[%s3 + $0xb4] sm:$0xf]
  %v200 = vld [vmem:[%s3 + $0xb8] sm:$0xf]
  %v201 = vld [vmem:[%s3 + $0xbc] sm:$0xf]
  %v202 = vld [vmem:[%s3 + $0xc0] sm:$0xf]
  %v203 = vld [vmem:[%s3 + $0xc4] sm:$0xf]
  %v204 = vld [vmem:[%s3 + $0xc8] sm:$0xf]
  %v205 = vld [vmem:[%s3 + $0xcc] sm:$0xf]
  %v206 = vld [vmem:[%s3 + $0xd0] sm:$0xf]
  %v207 = vld [vmem:[%s3 + $0xd4] sm:$0xf]
  %v208 = vld [vmem:[%s3 + $0xd8] sm:$0xf]
  %v209 = vld [vmem:[%s3 + $0xdc] sm:$0xf]
  %v210 = vld [vmem:[%s3 + $0xe0] sm:$0xf]
  %v211 = vld [vmem:[%s3 + $0xe4] sm:$0xf]
  %v212 = vld [vmem:[%s3 + $0xe8] sm:$0xf]
  %v213 = vld [vmem:[%s3 + $0xec] sm:$0xf]
  %v214 = vld [vmem:[%s3 + $0xf0] sm:$0xf]
  %v215 = vld [vmem:[%s3 + $0xf4] sm:$0xf]
  %v216 = vld [vmem:[%s3 + $0xf8] sm:$0xf]
  %v217 = vld [vmem:[%s3 + $0xfc] sm:$0xf]
  %v282 = vunpack.c.l.b16 %v154
  %v283 = vunpack.c.l.b16 %v155
  %v284 = vunpack.c.l.b16 %v156
  %v285 = vunpack.c.l.b16 %v157
  %v286 = vunpack.c.l.b16 %v158
  %v287 = vunpack.c.l.b16 %v159
  %v288 = vunpack.c.l.b16 %v160
  %v289 = vunpack.c.l.b16 %v161
  %v290 = vunpack.c.l.b16 %v162
  %v291 = vunpack.c.l.b16 %v163
  %v292 = vunpack.c.l.b16 %v164
  %v293 = vunpack.c.l.b16 %v165
  %v294 = vunpack.c.l.b16 %v166
  %v295 = vunpack.c.l.b16 %v167
  %v296 = vunpack.c.l.b16 %v168
  %v297 = vunpack.c.l.b16 %v169
  %v298 = vunpack.c.l.b16 %v170
  %v299 = vunpack.c.l.b16 %v171
  %v300 = vunpack.c.l.b16 %v172
  %v301 = vunpack.c.l.b16 %v173
  %v302 = vunpack.c.l.b16 %v174
  %v303 = vunpack.c.l.b16 %v175
  %v304 = vunpack.c.l.b16 %v176
  %v305 = vunpack.c.l.b16 %v177
  %v306 = vunpack.c.l.b16 %v178
  %v307 = vunpack.c.l.b16 %v179
  %v308 = vunpack.c.l.b16 %v180
  %v309 = vunpack.c.l.b16 %v181
  %v310 = vunpack.c.l.b16 %v182
  %v311 = vunpack.c.l.b16 %v183
  %v312 = vunpack.c.l.b16 %v184
  %v313 = vunpack.c.l.b16 %v185
  %v314 = vunpack.c.l.b16 %v186
  %v315 = vunpack.c.l.b16 %v187
  %v316 = vunpack.c.l.b16 %v188
  %v317 = vunpack.c.l.b16 %v189
  %v318 = vunpack.c.l.b16 %v190
  %v319 = vunpack.c.l.b16 %v191
  %v320 = vunpack.c.l.b16 %v192
  %v321 = vunpack.c.l.b16 %v193
  %v322 = vunpack.c.l.b16 %v194
  %v323 = vunpack.c.l.b16 %v195
  %v324 = vunpack.c.l.b16 %v196
  %v325 = vunpack.c.l.b16 %v197
  %v326 = vunpack.c.l.b16 %v198
  %v327 = vunpack.c.l.b16 %v199
  %v328 = vunpack.c.l.b16 %v200
  %v329 = vunpack.c.l.b16 %v201
  %v330 = vunpack.c.l.b16 %v202
  %v331 = vunpack.c.l.b16 %v203
  %v332 = vunpack.c.l.b16 %v204
  %v333 = vunpack.c.l.b16 %v205
  %v334 = vunpack.c.l.b16 %v206
  %v335 = vunpack.c.l.b16 %v207
  %v336 = vunpack.c.l.b16 %v208
  %v337 = vunpack.c.l.b16 %v209
  %v338 = vunpack.c.l.b16 %v210
  %v339 = vunpack.c.l.b16 %v211
  %v340 = vunpack.c.l.b16 %v212
  %v341 = vunpack.c.l.b16 %v213
  %v342 = vunpack.c.l.b16 %v214
  %v343 = vunpack.c.l.b16 %v215
  %v344 = vunpack.c.l.b16 %v216
  %v345 = vunpack.c.l.b16 %v217
  %v346 = vpack.c.b16 %v283, %v282
  %v347 = vpack.c.b16 %v285, %v284
  %v348 = vpack.c.b16 %v287, %v286
  %v349 = vpack.c.b16 %v289, %v288
  %v350 = vpack.c.b16 %v291, %v290
  %v351 = vpack.c.b16 %v293, %v292
  %v352 = vpack.c.b16 %v295, %v294
  %v353 = vpack.c.b16 %v297, %v296
  %v354 = vpack.c.b16 %v299, %v298
  %v355 = vpack.c.b16 %v301, %v300
  %v356 = vpack.c.b16 %v303, %v302
  %v357 = vpack.c.b16 %v305, %v304
  %v358 = vpack.c.b16 %v307, %v306
  %v359 = vpack.c.b16 %v309, %v308
  %v360 = vpack.c.b16 %v311, %v310
  %v361 = vpack.c.b16 %v313, %v312
  %v362 = vpack.c.b16 %v315, %v314
  %v363 = vpack.c.b16 %v317, %v316
  %v364 = vpack.c.b16 %v319, %v318
  %v365 = vpack.c.b16 %v321, %v320
  %v366 = vpack.c.b16 %v323, %v322
  %v367 = vpack.c.b16 %v325, %v324
  %v368 = vpack.c.b16 %v327, %v326
  %v369 = vpack.c.b16 %v329, %v328
  %v370 = vpack.c.b16 %v331, %v330
  %v371 = vpack.c.b16 %v333, %v332
  %v372 = vpack.c.b16 %v335, %v334
  %v373 = vpack.c.b16 %v337, %v336
  %v374 = vpack.c.b16 %v339, %v338
  %v375 = vpack.c.b16 %v341, %v340
  %v376 = vpack.c.b16 %v343, %v342
  %v377 = vpack.c.b16 %v345, %v344
  %410 = vmatpush.bf16.msra.mxu0 %v353
  %411 = vmatpush.bf16.msra.mxu0 %v352
  %412 = vmatpush.bf16.msra.mxu0 %v351
  %413 = vmatpush.bf16.msra.mxu0 %v350
  %414 = vmatpush.bf16.msra.mxu0 %v349
  %415 = vmatpush.bf16.msra.mxu0 %v348
  %416 = vmatpush.bf16.msra.mxu0 %v347
  %417 = vmatpush.bf16.msra.mxu0 %v346
  %418 = vmatmul.bf16.gmra.mxu0 %v150
  %v419 = vpop.f32.mrf.mxu0
  %v420 = vadd.f32 0.0, %v419
  %v421 = vpop.f32.mrf.mxu0
  %422 = vdwg.mxu0
  %423 = vmatpush.bf16.msra.mxu0 %v361
  %424 = vmatpush.bf16.msra.mxu0 %v360
  %425 = vmatpush.bf16.msra.mxu0 %v359
  %426 = vmatpush.bf16.msra.mxu0 %v358
  %427 = vmatpush.bf16.msra.mxu0 %v357
  %428 = vmatpush.bf16.msra.mxu0 %v356
  %429 = vmatpush.bf16.msra.mxu0 %v355
  %430 = vmatpush.bf16.msra.mxu0 %v354
  %431 = vmatmul.bf16.gmra.mxu0 %v151
  %v432 = vpop.f32.mrf.mxu0
  %v433 = vadd.f32 %v420, %v432
  %v434 = vpop.f32.mrf.mxu0
  %435 = vdwg.mxu0
  %436 = vmatpush.bf16.msra.mxu0 %v369
  %437 = vmatpush.bf16.msra.mxu0 %v368
  %438 = vmatpush.bf16.msra.mxu0 %v367
  %439 = vmatpush.bf16.msra.mxu0 %v366
  %440 = vmatpush.bf16.msra.mxu0 %v365
  %441 = vmatpush.bf16.msra.mxu0 %v364
  %442 = vmatpush.bf16.msra.mxu0 %v363
  %443 = vmatpush.bf16.msra.mxu0 %v362
  %444 = vmatmul.bf16.gmra.mxu0 %v152
  %v445 = vpop.f32.mrf.mxu0
  %v446 = vadd.f32 %v433, %v445
  %v447 = vpop.f32.mrf.mxu0
  %448 = vdwg.mxu0
  %449 = vmatpush.bf16.msra.mxu0 %v377
  %450 = vmatpush.bf16.msra.mxu0 %v376
  %451 = vmatpush.bf16.msra.mxu0 %v375
  %452 = vmatpush.bf16.msra.mxu0 %v374
  %453 = vmatpush.bf16.msra.mxu0 %v373
  %454 = vmatpush.bf16.msra.mxu0 %v372
  %455 = vmatpush.bf16.msra.mxu0 %v371
  %456 = vmatpush.bf16.msra.mxu0 %v370
  %457 = vmatmul.bf16.gmra.mxu0 %v153
  %v458 = vpop.f32.mrf.mxu0
  %v459 = vadd.f32 %v446, %v458
  %v460 = vpop.f32.mrf.mxu0
  %461 = vdwg.mxu0
  %v462 = vld [vmem:[%s4] sm:$0x1]
  %v464 = vperm.slane %v462, 0
  %v466 = vadd.f32 %v459, %v464
  %vm467 = vcmask 162816
  %468 = vst.msk [vmem:[%s5] sm:$0xff] %vm467, %v466
  // Predicated region
  $region22: #{dqn_forward.1} parent=0 // pred_check
    _
  $region23: #{dqn_forward.1} parent=0 // pred_check_branch
    %470 = sbr.rel (0) target = $region25
  $region24: #{dqn_forward.1} parent=0 // pred_region
    _
  $region25: #{dqn_forward.1} parent=0 // pred_fallthru
    _
  // Predicated region
  $region26: #{dqn_forward.1} parent=0 // pred_check
    _
  $region27: #{dqn_forward.1} parent=0 // pred_check_branch
    %472 = sbr.rel (0) target = $region29
  $region28: #{dqn_forward.1} parent=0 // pred_region
    _
  $region29: #{dqn_forward.1} parent=0 // pred_fallthru
    _

</llo_original>
